<compile_context>
chip_gen: v5e
topology: v5e:2x2
jax: 0.10.0
libtpu: 0.0.40
codegen_flags: <defaults>
</compile_context>

<pallas_src>
import functools

import jax
import jax.numpy as jnp
from jax.experimental import pallas as pl
from jax.experimental.pallas import tpu as pltpu

CIN, COUT, KH, KW, PAD = 3, 85, 5, 5, 2
K_RAW = CIN * KH * KW          # 75 (contraction dim, kept unpadded in HBM)
XYWH = 4                       # first 4 output channels get sigmoid + grid (grid is all ones)
TM_MAX = 2048                  # lane-tile upper bound (review: 1024-2048; per-step buffers stay < 1 MiB)


def conv_head_kernel(p_ref, w_ref, mask_ref, o_ref):
    # Conv2d(3->85, 5x5, stride 1, pad 2, bias=False) as a bf16 MXU GEMM with f32 accumulation:
    #   (85, 75) @ (75, tm) -> (85, tm); channels land on sublanes, pixels stay lane-dense.
    y = jnp.dot(w_ref[...], p_ref[0], preferred_element_type=jnp.float32)
    y = jnp.maximum(y, 0.0)                                   # ReLU
    # exact sigmoid (EUP exp + divide; kernel is HBM-bound so this is free) + grid (all ones)
    xywh = 1.0 / (1.0 + jnp.exp(-y)) + 1.0
    # mask_ref is a resident (COUT, 1) 0/1 channel mask: 1.0 on the first 4 output channels.
    o_ref[0] = jnp.where(mask_ref[...] > 0.5, xywh, y).astype(o_ref.dtype)


def _pick_tile(hw, n, tm_max=TM_MAX):
    """Lane tile over pixels: multiple of 128, capped at TM_MAX, >=2 total grid steps when possible."""
    hw128 = pl.cdiv(hw, 128) * 128
    tm = min(tm_max, hw128)
    if n * pl.cdiv(hw128, tm) < 2 and hw128 >= 256:           # keep both v7x TensorCores busy
        tm = pl.cdiv(hw128 // 2, 128) * 128
    return tm


@functools.partial(jax.jit, static_argnames=("tm",))
def net_forward(x, w, *, tm=None):
    """x: (N, 3, H, W) float32 NCHW (as in PyTorch); w: (85, 3, 5, 5) OIHW.
    Returns (N, 85, H, W) in bfloat16 (cast at the consumer if f32 is required)."""
    N, C, H, W = x.shape
    assert C == CIN
    HW = H * W
    tm = _pick_tile(HW, N) if tm is None else tm
    hw_pad = pl.cdiv(HW, tm) * tm

    # --- transposed im2col in XLA (bf16); k index = c*25 + ki*5 + kj matches OIHW weight flattening ---
    xb = x.astype(jnp.bfloat16)
    xp = jnp.pad(xb, ((0, 0), (0, 0), (PAD, PAD), (PAD, PAD)))
    shifts = jnp.stack([xp[:, :, ki:ki + H, kj:kj + W]
                        for ki in range(KH) for kj in range(KW)], axis=2)   # (N, Cin, 25, H, W)
    patches = shifts.reshape(N, K_RAW, HW)                                  # (N, 75, HW) bf16
    patches = jnp.pad(patches, ((0, 0), (0, 0), (0, hw_pad - HW)))          # (N, 75, hw_pad)

    w2 = w.reshape(COUT, K_RAW).astype(jnp.bfloat16)                        # (85, 75), resident in VMEM

    # hoisted channel mask: 1.0 for channels [0, 4), 0.0 elsewhere (broadcast along lanes in-kernel)
    chan_mask = (jnp.arange(COUT) < XYWH).astype(jnp.float32).reshape(COUT, 1)

    cost = pl.CostEstimate(
        flops=2 * N * hw_pad * K_RAW * COUT,
        transcendentals=N * hw_pad * COUT,
        bytes_accessed=(2 * N * K_RAW * hw_pad          # bf16 patch read
                        + 2 * COUT * K_RAW + 4 * COUT   # resident weights + mask
                        + 2 * N * COUT * hw_pad))       # bf16 output write

    out = pl.pallas_call(
        conv_head_kernel,
        out_shape=jax.ShapeDtypeStruct((N, COUT, hw_pad), jnp.bfloat16),
        grid_spec=pltpu.PrefetchScalarGridSpec(
            num_scalar_prefetch=0,
            grid=(N, hw_pad // tm),
            in_specs=[
                pl.BlockSpec((1, K_RAW, tm), lambda n, i: (n, 0, i)),   # patches: streamed per (image, tile)
                pl.BlockSpec((COUT, K_RAW), lambda n, i: (0, 0)),       # weights: resident
                pl.BlockSpec((COUT, 1), lambda n, i: (0, 0)),           # channel mask: resident
            ],
            out_specs=pl.BlockSpec((1, COUT, tm), lambda n, i: (n, 0, i)),
        ),
        compiler_params=pltpu.CompilerParams(
            dimension_semantics=("parallel", "parallel")),              # independent tiles -> megacore shard
        cost_estimate=cost,
    )(patches, w2, chan_mask)

    # free layout fixup: (N, 85, HW) is already NCHW; only slice away lane padding when HW % tm != 0
    out = out[:, :, :HW].reshape(N, COUT, H, W)
    return out


@jax.jit
def reference_forward(x, w):
    y = jax.lax.conv_general_dilated(
        x, w, window_strides=(1, 1), padding=((PAD, PAD), (PAD, PAD)),
        dimension_numbers=("NCHW", "OIHW", "NCHW"))
    y = jnp.maximum(y, 0.0)
    xywh = jax.nn.sigmoid(y[:, :XYWH]) + 1.0           # self.grid is all ones
    return jnp.concatenate([xywh, y[:, XYWH:]], axis=1)


if __name__ == "__main__":
    key = jax.random.PRNGKey(0)
    kx, kw = jax.random.split(key)
    N, H, W = 2, 16, 16
    x = jax.random.normal(kx, (N, CIN, H, W), dtype=jnp.float32)
    # deterministic "kaiming-ish" init for conv weights (no checkpoint load)
    w = 0.1 * jax.random.normal(kw, (COUT, CIN, KH, KW), dtype=jnp.float32)

    out = jax.block_until_ready(net_forward(x, w))
    ref = jax.block_until_ready(reference_forward(x, w))

    assert out.shape == (N, COUT, H, W), out.shape
    err = float(jnp.max(jnp.abs(out.astype(jnp.float32) - ref)))
    # bf16 MXU inputs + bf16 output store -> relaxed tolerance vs the pure-f32 reference
    assert err < 6e-2, err
    print("KERNEL_OK")
</pallas_src>

<mosaic_0001>
module attributes {stable_mosaic.version = 11 : i64} {
  func.func @conv_head_kernel(%arg0: i32, %arg1: i32, %arg2: memref<1x75x256xbf16, #tpu.memory_space<vmem>>, %arg3: memref<85x75xbf16, #tpu.memory_space<vmem>>, %arg4: memref<85x1xf32, #tpu.memory_space<vmem>>, %arg5: memref<1x85x256xbf16, #tpu.memory_space<vmem>>) attributes {dimension_semantics = [#tpu.dimension_semantics<parallel>, #tpu.dimension_semantics<parallel>], iteration_bounds = array<i64: 2, 1>, scalar_prefetch = 0 : i64, scratch_operands = 0 : i64, tpu.core_type = #tpu.core_type<tc>, window_params = [{transform_indices = @transform_0, window_bounds = array<i64: 1, 75, 256>}, {pipeline_mode = #tpu.pipeline_mode<synchronous>, transform_indices = @transform_1, window_bounds = array<i64: 85, 75>}, {pipeline_mode = #tpu.pipeline_mode<synchronous>, transform_indices = @transform_2, window_bounds = array<i64: 85, 1>}, {transform_indices = @transform_3, window_bounds = array<i64: 1, 85, 256>}]} {
    %c0 = arith.constant 0 : index
    %c0_0 = arith.constant 0 : index
    %0 = vector.load %arg3[%c0, %c0_0] : memref<85x75xbf16, #tpu.memory_space<vmem>>, vector<85x75xbf16>
    %c0_1 = arith.constant 0 : index
    %c0_2 = arith.constant 0 : index
    %c0_3 = arith.constant 0 : index
    %1 = vector.load %arg2[%c0_1, %c0_2, %c0_3] : memref<1x75x256xbf16, #tpu.memory_space<vmem>>, vector<1x75x256xbf16>
    %2 = vector.shape_cast %1 : vector<1x75x256xbf16> to vector<75x256xbf16>
    %cst = arith.constant dense<0.000000e+00> : vector<85x256xf32>
    %3 = tpu.matmul %0, %2, %cst {dimension_numbers = #tpu.dot_dimension_numbers<[1], [0], [0], [1], [0, 0, 1, 1], [], []>} : vector<85x75xbf16>, vector<75x256xbf16>, vector<85x256xf32> -> vector<85x256xf32>
    %cst_4 = arith.constant 0.000000e+00 : f32
    %4 = vector.broadcast %cst_4 : f32 to vector<85x256xf32>
    %5 = arith.maximumf %3, %4 : vector<85x256xf32>
    %cst_5 = arith.constant 0.000000e+00 : f32
    %6 = vector.broadcast %cst_5 : f32 to vector<85x256xf32>
    %7 = arith.subf %6, %5 : vector<85x256xf32>
    %8 = math.exp %7 : vector<85x256xf32>
    %cst_6 = arith.constant 1.000000e+00 : f32
    %9 = vector.broadcast %cst_6 : f32 to vector<85x256xf32>
    %10 = arith.addf %9, %8 : vector<85x256xf32>
    %cst_7 = arith.constant 1.000000e+00 : f32
    %11 = vector.broadcast %cst_7 : f32 to vector<85x256xf32>
    %12 = arith.divf %11, %10 : vector<85x256xf32>
    %cst_8 = arith.constant 1.000000e+00 : f32
    %13 = vector.broadcast %cst_8 : f32 to vector<85x256xf32>
    %14 = arith.addf %12, %13 : vector<85x256xf32>
    %c0_9 = arith.constant 0 : index
    %c0_10 = arith.constant 0 : index
    %15 = vector.load %arg4[%c0_9, %c0_10] : memref<85x1xf32, #tpu.memory_space<vmem>>, vector<85x1xf32>
    %cst_11 = arith.constant 5.000000e-01 : f32
    %16 = vector.broadcast %cst_11 : f32 to vector<85x1xf32>
    %17 = arith.cmpf ogt, %15, %16 : vector<85x1xf32>
    %18 = vector.shape_cast %17 : vector<85x1xi1> to vector<85x1xi1>
    %19 = vector.broadcast %18 : vector<85x1xi1> to vector<85x256xi1>
    %20 = arith.select %19, %14, %5 : vector<85x256xi1>, vector<85x256xf32>
    %21 = arith.truncf %20 : vector<85x256xf32> to vector<85x256xbf16>
    %c0_12 = arith.constant 0 : index
    %c0_13 = arith.constant 0 : index
    %c0_14 = arith.constant 0 : index
    %22 = vector.load %arg5[%c0_12, %c0_13, %c0_14] : memref<1x85x256xbf16, #tpu.memory_space<vmem>>, vector<1x85x256xbf16>
    %23 = vector.shape_cast %22 : vector<1x85x256xbf16> to vector<85x256xbf16>
    %24 = vector.shape_cast %21 : vector<85x256xbf16> to vector<1x85x256xbf16>
    tpu.vector_store %arg5[%c0_12, %c0_13, %c0_14], %24 {strides = array<i32>} : memref<1x85x256xbf16, #tpu.memory_space<vmem>>, vector<1x85x256xbf16>,
    return
  }
  func.func @transform_0(%arg0: i32, %arg1: i32) -> (i32, i32, i32) {
    %c0_i32 = arith.constant 0 : i32
    %c0_i32_0 = arith.constant 0 : i32
    return %arg0, %c0_i32, %arg1 : i32, i32, i32
  }
  func.func @transform_1(%arg0: i32, %arg1: i32) -> (i32, i32) {
    %c0_i32 = arith.constant 0 : i32
    %c0_i32_0 = arith.constant 0 : i32
    %c0_i32_1 = arith.constant 0 : i32
    return %c0_i32, %c0_i32_0 : i32, i32
  }
  func.func @transform_2(%arg0: i32, %arg1: i32) -> (i32, i32) {
    %c0_i32 = arith.constant 0 : i32
    %c0_i32_0 = arith.constant 0 : i32
    %c0_i32_1 = arith.constant 0 : i32
    return %c0_i32, %c0_i32_0 : i32, i32
  }
  func.func @transform_3(%arg0: i32, %arg1: i32) -> (i32, i32, i32) {
    %c0_i32 = arith.constant 0 : i32
    %c0_i32_0 = arith.constant 0 : i32
    return %arg0, %c0_i32, %arg1 : i32, i32, i32
  }
}

</mosaic_0001>

<llo_original>
// kernel: net_forward.1
$region0: #{net_forward.1}
  #allocation0 [shape = 'u32[]', space=smem, size = 0x4, offset = 0x4, fixed_abs, tag = 'smem constant byte address 0x4 - core index']
  #allocation1 [shape = 'u32[72,128]{1,0:T(1,128)}', space=vmem, size = 0x9000, scoped, tag = 'internal scratch']
  %s0 = inlined_call_operand.vmem [shape: bf16[2,75,256], index: 0, kind: input, shape index: {}]
  %s1 = inlined_call_operand.vmem [shape: bf16[85,75], index: 1, kind: input, shape index: {}]
  %s2 = inlined_call_operand.vmem [shape: f32[85,1], index: 2, kind: input, shape index: {}]
  %s3 = inlined_call_operand.vmem [shape: bf16[2,85,256], index: 3, kind: output, shape index: {}]
  %s4 = sld [smem:[#allocation0]]
  $region45: #{net_forward.1} parent=0
    _
  %s6 = ssub.s32 1, %s4
  %s7 = scalar_select 0, %s6, %s4
  loop: start=0, step=1, limit=4
  $region2: #{net_forward.1} parent=0 // loop_pre_header
    _
  $region3: #{net_forward.1} parent=0 // loop_header
    %s9 = sphi 0, %s13
    %p10 = scmp.ge.s32.totalorder %s9, 4
    %s16 = sphi 0, %s28
    %s17 = sphi 0, %s24
    %s18 = sphi 0, %s16
    %s19 = sphi 0, %s17
    %s20 = sphi 0, %s18
    %s21 = sphi 0, %s19
    %s33 = sphi 0, %s35
    %s36 = sphi 0, %s33
    %s37 = sphi 0, %s36
    %s53 = sphi 0, %s37
    %s57 = sphi 0, %s57
    %s59 = sphi 0, %s57
    %s60 = sphi 0, %s59
    %s74 = sphi 0, %s60
    %s78 = sphi 0, %s78
    %s80 = sphi 0, %s78
    %s81 = sphi 0, %s80
    %s95 = sphi 0, %s81
    %s103 = sphi 0, %s105
    %s106 = sphi 0, %s103
    %s107 = sphi 0, %s106
    %s123 = sphi 0, %s107
  $region4: #{net_forward.1} parent=0 // loop_header_branch
    %12 = sbr.rel (%p10) target = $region8
  $region5: #{net_forward.1} parent=0 // loop_body
    %s14 = ssub.s32 %s9, 1
    %s15 = ssub.s32 %s9, 2
    %s22 = sadd.s32 1, %s17
    %p23 = scmp.ge.s32.totalorder %s22, 1
    %s24 = scalar_select %p23, 0, %s22
    %s25 = sadd.s32 1, %s16
    %s26 = scalar_select %p23, %s25, %s16
    %p27 = scmp.ge.s32.totalorder %s26, 2
    %s28 = scalar_select %p27, 0, %s26
    %s29 = ssub.s32 %s16, %s28
    %s30 = ssub.s32 %s17, %s24
    %s31 = sor.u32 %s29, %s30
    %p32 = scmp.eq.s32.totalorder %s31, 0
    %s34 = sadd.s32 %s33, 1
    %s35 = scalar_select %p32, %s33, %s34
    %p38 = pneg %p32
    %p39 = scmp.eq.s32.totalorder %s9, 1
    %p40 = por %p38, %p39
    %p41 = scmp.ne.s32.totalorder %s33, %s36
    %p42 = scmp.eq.s32.totalorder %s9, 0
    %p43 = por %p41, %p42
    %p44 = scmp.ne.s32.totalorder %s33, %s36
    %p45 = scmp.eq.s32.totalorder %s14, 1
    %p46 = por %p44, %p45
    %p47 = scmp.ne.s32.totalorder %s36, %s37
    %p48 = scmp.eq.s32.totalorder %s14, 0
    %p49 = por %p47, %p48
    %p50 = scmp.ne.s32.totalorder %s36, %s37
    %p51 = scmp.eq.s32.totalorder %s15, 1
    %p52 = por %p50, %p51
    %p54 = scmp.ne.s32.totalorder %s37, %s53
    %p55 = scmp.eq.s32.totalorder %s15, 0
    %p56 = por %p54, %p55
    %s58 = sadd.s32 %s57, 1
    %p61 = scmp.eq.s32.totalorder %s9, 1
    %p62 = scmp.ne.s32.totalorder %s57, %s59
    %p63 = scmp.eq.s32.totalorder %s9, 0
    %p64 = por %p62, %p63
    %p65 = scmp.ne.s32.totalorder %s57, %s59
    %p66 = scmp.eq.s32.totalorder %s14, 1
    %p67 = por %p65, %p66
    %p68 = scmp.ne.s32.totalorder %s59, %s60
    %p69 = scmp.eq.s32.totalorder %s14, 0
    %p70 = por %p68, %p69
    %p71 = scmp.ne.s32.totalorder %s59, %s60
    %p72 = scmp.eq.s32.totalorder %s15, 1
    %p73 = por %p71, %p72
    %p75 = scmp.ne.s32.totalorder %s60, %s74
    %p76 = scmp.eq.s32.totalorder %s15, 0
    %p77 = por %p75, %p76
    %s79 = sadd.s32 %s78, 1
    %p82 = scmp.eq.s32.totalorder %s9, 1
    %p83 = scmp.ne.s32.totalorder %s78, %s80
    %p84 = scmp.eq.s32.totalorder %s9, 0
    %p85 = por %p83, %p84
    %p86 = scmp.ne.s32.totalorder %s78, %s80
    %p87 = scmp.eq.s32.totalorder %s14, 1
    %p88 = por %p86, %p87
    %p89 = scmp.ne.s32.totalorder %s80, %s81
    %p90 = scmp.eq.s32.totalorder %s14, 0
    %p91 = por %p89, %p90
    %p92 = scmp.ne.s32.totalorder %s80, %s81
    %p93 = scmp.eq.s32.totalorder %s15, 1
    %p94 = por %p92, %p93
    %p96 = scmp.ne.s32.totalorder %s81, %s95
    %p97 = scmp.eq.s32.totalorder %s15, 0
    %p98 = por %p96, %p97
    %s99 = ssub.s32 %s16, %s28
    %s100 = ssub.s32 %s17, %s24
    %s101 = sor.u32 %s99, %s100
    %p102 = scmp.eq.s32.totalorder %s101, 0
    %s104 = sadd.s32 %s103, 1
    %s105 = scalar_select %p102, %s103, %s104
    %p108 = pneg %p102
    %p109 = scmp.eq.s32.totalorder %s9, 1
    %p110 = por %p108, %p109
    %p111 = scmp.ne.s32.totalorder %s103, %s106
    %p112 = scmp.eq.s32.totalorder %s9, 0
    %p113 = por %p111, %p112
    %p114 = scmp.ne.s32.totalorder %s103, %s106
    %p115 = scmp.eq.s32.totalorder %s14, 1
    %p116 = por %p114, %p115
    %p117 = scmp.ne.s32.totalorder %s106, %s107
    %p118 = scmp.eq.s32.totalorder %s14, 0
    %p119 = por %p117, %p118
    %p120 = scmp.ne.s32.totalorder %s106, %s107
    %p121 = scmp.eq.s32.totalorder %s15, 1
    %p122 = por %p120, %p121
    %p124 = scmp.ne.s32.totalorder %s107, %s123
    %p125 = scmp.eq.s32.totalorder %s15, 0
    %p126 = por %p124, %p125
    %p127 = scmp.le.s32.totalorder 1, %s9
    %p128 = scmp.lt.s32.totalorder %s9, 3
    %p129 = pnand %p127, %p128
    %p130 = pneg %p129
    // Predicated region
    $region9: #{net_forward.1} parent=5 // pred_check
      _
    $region10: #{net_forward.1} parent=5 // pred_check_branch
      %132 = sbr.rel (%p129) target = $region12
    $region11: #{net_forward.1} parent=5 // pred_region
      %s133 = ssub.s32 %s9, 1
      // Predicated region
      $region13: #{net_forward.1} parent=11 // pred_check
        %p134 = pneg %p70
      $region14: #{net_forward.1} parent=11 // pred_check_branch
        %136 = sbr.rel (%p134) target = $region16
      $region15: #{net_forward.1} parent=11 // pred_region
        _
      $region16: #{net_forward.1} parent=11 // pred_fallthru
        _
      // Predicated region
      $region17: #{net_forward.1} parent=11 // pred_check
        %p137 = pneg %p91
      $region18: #{net_forward.1} parent=11 // pred_check_branch
        %139 = sbr.rel (%p137) target = $region20
      $region19: #{net_forward.1} parent=11 // pred_region
        _
      $region20: #{net_forward.1} parent=11 // pred_fallthru
        _
    $region12: #{net_forward.1} parent=5 // pred_fallthru
      _
    %p140 = scmp.lt.s32.totalorder %s9, 2
    // Predicated region
    $region21: #{net_forward.1} parent=5 // pred_check
      %p141 = pneg %p140
    $region22: #{net_forward.1} parent=5 // pred_check_branch
      %143 = sbr.rel (%p141) target = $region24
    $region23: #{net_forward.1} parent=5 // pred_region
      // Predicated region
      $region25: #{net_forward.1} parent=23 // pred_check
        %p144 = pneg %p43
      $region26: #{net_forward.1} parent=23 // pred_check_branch
        %146 = sbr.rel (%p144) target = $region28
      $region27: #{net_forward.1} parent=23 // pred_region
        %s147 = smul.u32 2, %s17
        %p148 = scmp.lt.s32.totalorder %s16, 1
        %s149 = scalar_select %p148, %s16, 1
        %p150 = scmp.lt.s32.totalorder %s147, 1
        %s151 = scalar_select %p150, %s147, 1
        %s152 = smul.addr %s149, 20
        %s153 = sadd.s32 %s151, %s152
        %s154 = smul.addr %s153, 4
        %s155 = scalar_lea.vmem %s0, %s154
        %s156 = smul.u32 2, %s17
      $region28: #{net_forward.1} parent=23 // pred_fallthru
        _
    $region24: #{net_forward.1} parent=5 // pred_fallthru
      _
    %p157 = scmp.le.s32.totalorder 1, %s9
    %p158 = scmp.lt.s32.totalorder %s9, 3
    %p159 = pnand %p157, %p158
    %p160 = pneg %p159
    // Predicated region
    $region29: #{net_forward.1} parent=5 // pred_check
      _
    $region30: #{net_forward.1} parent=5 // pred_check_branch
      %162 = sbr.rel (%p159) target = $region32
    $region31: #{net_forward.1} parent=5 // pred_region
      %s163 = ssub.s32 %s9, 1
      %s164 = smul.u32 2, %s19
      %p165 = scmp.lt.s32.totalorder %s18, 1
      %s166 = scalar_select %p165, %s18, 1
      %p167 = scmp.lt.s32.totalorder %s164, 1
      %s168 = scalar_select %p167, %s164, 1
      %s169 = smul.addr %s166, 20
      %s170 = sadd.s32 %s168, %s169
      %s171 = smul.addr %s170, 4
      %s172 = scalar_lea.vmem %s0, %s171
      %p173 = pneg %p49
      %p174 = pneg %p46
      %p175 = pneg %p70
      %p176 = pneg %p67
      %p177 = pneg %p91
      %p178 = pneg %p88
      %p179 = pneg %p119
      %p180 = pneg %p116
      %s181 = smul.u32 2, %s19
      %p182 = scmp.lt.s32.totalorder %s18, 1
      %s183 = scalar_select %p182, %s18, 1
      %p184 = scmp.lt.s32.totalorder %s181, 1
      %s185 = scalar_select %p184, %s181, 1
      %s186 = smul.addr %s183, 22
      %s187 = sadd.s32 %s185, %s186
      %s188 = smul.addr %s187, 4
      %s189 = scalar_lea.vmem %s3, %s188
      %s190 = smul.u32 2, %s19
      %p191 = scmp.lt.s32.totalorder %s18, 1
      %s192 = scalar_select %p191, %s18, 1
      %p193 = scmp.lt.s32.totalorder %s190, 1
      %s194 = scalar_select %p193, %s190, 1
      %s195 = smul.addr %s192, 20
      %s196 = sadd.s32 %s194, %s195
      %s197 = smul.addr %s196, 4
      %s198 = scalar_lea.vmem %s0, %s197
      %s199 = smul.u32 2, %s19
      %s200 = smul.u32 2, %s19
      %p201 = scmp.lt.s32.totalorder %s18, 1
      %s202 = scalar_select %p201, %s18, 1
      %p203 = scmp.lt.s32.totalorder %s200, 1
      %s204 = scalar_select %p203, %s200, 1
      %s205 = smul.addr %s202, 22
      %s206 = sadd.s32 %s204, %s205
      %s207 = smul.addr %s206, 4
      %s208 = scalar_lea.vmem %s3, %s207
      %s209 = smul.u32 2, %s19
      %v211 = vld [vmem:[%s1] sm:$0xf]
      %v212 = vld [vmem:[%s1 + $0x4] sm:$0xf]
      %v213 = vld [vmem:[%s1 + $0x8] sm:$0xf]
      %v214 = vld [vmem:[%s1 + $0xc] sm:$0xf]
      %v215 = vld [vmem:[%s1 + $0x10] sm:$0xf]
      %v216 = vld [vmem:[%s1 + $0x14] sm:$0xf]
      %v217 = vld [vmem:[%s1 + $0x18] sm:$0xf]
      %v218 = vld [vmem:[%s1 + $0x1c] sm:$0xf]
      %v219 = vld [vmem:[%s1 + $0x20] sm:$0xf]
      %v220 = vld [vmem:[%s1 + $0x24] sm:$0xf]
      %v221 = vld [vmem:[%s1 + $0x28] sm:$0x7]
      %v222 = vld [vmem:[%s198] sm:$0xff]
      %v223 = vld [vmem:[%s198 + $0x8] sm:$0xff]
      %v224 = vld [vmem:[%s198 + $0x10] sm:$0xff]
      %v225 = vld [vmem:[%s198 + $0x18] sm:$0xff]
      %v226 = vld [vmem:[%s198 + $0x20] sm:$0xff]
      %v227 = vld [vmem:[%s198 + $0x28] sm:$0xff]
      %v228 = vld [vmem:[%s198 + $0x30] sm:$0xff]
      %v229 = vld [vmem:[%s198 + $0x38] sm:$0xff]
      %v230 = vld [vmem:[%s198 + $0x40] sm:$0xff]
      %v231 = vld [vmem:[%s198 + $0x48] sm:$0x33]
      %v243 = vunpack.c.l.b16 %v211
      %v244 = vunpack.c.l.b16 %v212
      %v245 = vunpack.c.l.b16 %v213
      %v246 = vunpack.c.l.b16 %v214
      %v247 = vunpack.c.l.b16 %v215
      %v248 = vunpack.c.l.b16 %v216
      %v249 = vunpack.c.l.b16 %v217
      %v250 = vunpack.c.l.b16 %v218
      %v251 = vunpack.c.l.b16 %v219
      %v252 = vunpack.c.l.b16 %v220
      %v253 = vunpack.c.l.b16 %v221
      %v254 = vpack.c.b16 %v244, %v243
      %v255 = vpack.c.b16 %v246, %v245
      %v256 = vpack.c.b16 %v248, %v247
      %v257 = vpack.c.b16 %v250, %v249
      %v258 = vpack.c.b16 %v252, %v251
      %v259 = vpack.c.b16 %v253, %v253
      %v270 = vunpack.c.l.b16 %v222
      %v271 = vunpack.c.h.b16 %v222
      %v272 = vunpack.c.l.b16 %v223
      %v273 = vunpack.c.h.b16 %v223
      %v274 = vunpack.c.l.b16 %v224
      %v275 = vunpack.c.h.b16 %v224
      %v276 = vunpack.c.l.b16 %v225
      %v277 = vunpack.c.h.b16 %v225
      %v278 = vunpack.c.l.b16 %v226
      %v279 = vunpack.c.h.b16 %v226
      %v280 = vunpack.c.l.b16 %v227
      %v281 = vunpack.c.h.b16 %v227
      %v282 = vunpack.c.l.b16 %v228
      %v283 = vunpack.c.h.b16 %v228
      %v284 = vunpack.c.l.b16 %v229
      %v285 = vunpack.c.h.b16 %v229
      %v286 = vunpack.c.l.b16 %v230
      %v287 = vunpack.c.h.b16 %v230
      %v288 = vunpack.c.l.b16 %v231
      %v289 = vunpack.c.h.b16 %v231
      %v290 = vpack.c.b16 %v272, %v270
      %v291 = vpack.c.b16 %v273, %v271
      %v292 = vpack.c.b16 %v276, %v274
      %v293 = vpack.c.b16 %v277, %v275
      %v294 = vpack.c.b16 %v280, %v278
      %v295 = vpack.c.b16 %v281, %v279
      %v296 = vpack.c.b16 %v284, %v282
      %v297 = vpack.c.b16 %v285, %v283
      %v298 = vpack.c.b16 %v288, %v286
      %v299 = vpack.c.b16 %v289, %v287
      %vm308 = vcmask 613376
      %v310 = vsel %vm308, %v254, 0
      %v313 = vsel %vm308, %v255, 0
      %v316 = vsel %vm308, %v256, 0
      %v319 = vsel %vm308, %v257, 0
      %v322 = vsel %vm308, %v258, 0
      %v325 = vsel %vm308, %v259, 0
      %vm327 = vcmask 1044480
      %vm328 = vcmask 1045504
      %v329 = vsel %vm327, 4294967295, 65535
      %v330 = vsel %vm328, %v329, 0
      %v332 = vand.u32 %v298, %v330
      %v335 = vand.u32 %v299, %v330
      %337 = vmatpush.bf16.msra.mxu0 0
      %338 = vmatpush.bf16.msra.mxu0 0
      %339 = vmatpush.bf16.msra.mxu0 0
      %340 = vmatpush.bf16.msra.mxu0 %v332
      %341 = vmatpush.bf16.msra.mxu0 %v296
      %342 = vmatpush.bf16.msra.mxu0 %v294
      %343 = vmatpush.bf16.msra.mxu0 %v292
      %344 = vmatpush.bf16.msra.mxu0 %v290
      %345 = vmatmul.bf16.gmra.mxu0 %v310
      %v346 = vpop.f32.mrf.mxu0
      %v347 = vadd.f32 0.0, %v346
      %v348 = vpop.f32.mrf.mxu0
      %v349 = vadd.f32 0.0, %v348
      %350 = vmatmul.bf16.gmra.mxu0 %v313
      %v351 = vpop.f32.mrf.mxu0
      %v352 = vadd.f32 0.0, %v351
      %v353 = vpop.f32.mrf.mxu0
      %v354 = vadd.f32 0.0, %v353
      %355 = vmatmul.bf16.gmra.mxu0 %v316
      %v356 = vpop.f32.mrf.mxu0
      %v357 = vadd.f32 0.0, %v356
      %v358 = vpop.f32.mrf.mxu0
      %v359 = vadd.f32 0.0, %v358
      %360 = vmatmul.bf16.gmra.mxu0 %v319
      %v361 = vpop.f32.mrf.mxu0
      %v362 = vadd.f32 0.0, %v361
      %v363 = vpop.f32.mrf.mxu0
      %v364 = vadd.f32 0.0, %v363
      %365 = vmatmul.bf16.gmra.mxu0 %v322
      %v366 = vpop.f32.mrf.mxu0
      %v367 = vadd.f32 0.0, %v366
      %v368 = vpop.f32.mrf.mxu0
      %v369 = vadd.f32 0.0, %v368
      %370 = vmatmul.bf16.gmra.mxu0 %v325
      %v371 = vpop.f32.mrf.mxu0
      %v372 = vadd.f32 0.0, %v371
      %v373 = vpop.f32.mrf.mxu0
      %374 = vdwg.mxu0
      %375 = vmatpush.bf16.msra.mxu0 0
      %376 = vmatpush.bf16.msra.mxu0 0
      %377 = vmatpush.bf16.msra.mxu0 0
      %378 = vmatpush.bf16.msra.mxu0 %v335
      %379 = vmatpush.bf16.msra.mxu0 %v297
      %380 = vmatpush.bf16.msra.mxu0 %v295
      %381 = vmatpush.bf16.msra.mxu0 %v293
      %382 = vmatpush.bf16.msra.mxu0 %v291
      %383 = vmatmul.bf16.gmra.mxu0 %v310
      %v384 = vpop.f32.mrf.mxu0
      %v385 = vadd.f32 0.0, %v384
      %v386 = vpop.f32.mrf.mxu0
      %v387 = vadd.f32 0.0, %v386
      %388 = vmatmul.bf16.gmra.mxu0 %v313
      %v389 = vpop.f32.mrf.mxu0
      %v390 = vadd.f32 0.0, %v389
      %v391 = vpop.f32.mrf.mxu0
      %v392 = vadd.f32 0.0, %v391
      %393 = vmatmul.bf16.gmra.mxu0 %v316
      %v394 = vpop.f32.mrf.mxu0
      %v395 = vadd.f32 0.0, %v394
      %v396 = vpop.f32.mrf.mxu0
      %v397 = vadd.f32 0.0, %v396
      %398 = vmatmul.bf16.gmra.mxu0 %v319
      %v399 = vpop.f32.mrf.mxu0
      %v400 = vadd.f32 0.0, %v399
      %v401 = vpop.f32.mrf.mxu0
      %v402 = vadd.f32 0.0, %v401
      %403 = vmatmul.bf16.gmra.mxu0 %v322
      %v404 = vpop.f32.mrf.mxu0
      %v405 = vadd.f32 0.0, %v404
      %v406 = vpop.f32.mrf.mxu0
      %v407 = vadd.f32 0.0, %v406
      %408 = vmatmul.bf16.gmra.mxu0 %v325
      %v409 = vpop.f32.mrf.mxu0
      %v410 = vadd.f32 0.0, %v409
      %v411 = vpop.f32.mrf.mxu0
      %412 = vdwg.mxu0
      %v413 = vmax.f32 %v347, 0.0
      %v414 = vmax.f32 %v385, 0.0
      %v415 = vmax.f32 %v349, 0.0
      %v416 = vmax.f32 %v387, 0.0
      %v417 = vmax.f32 %v352, 0.0
      %v418 = vmax.f32 %v390, 0.0
      %v419 = vmax.f32 %v354, 0.0
      %v420 = vmax.f32 %v392, 0.0
      %v421 = vmax.f32 %v357, 0.0
      %v422 = vmax.f32 %v395, 0.0
      %v423 = vmax.f32 %v359, 0.0
      %v424 = vmax.f32 %v397, 0.0
      %v425 = vmax.f32 %v362, 0.0
      %v426 = vmax.f32 %v400, 0.0
      %v427 = vmax.f32 %v364, 0.0
      %v428 = vmax.f32 %v402, 0.0
      %v429 = vmax.f32 %v367, 0.0
      %v430 = vmax.f32 %v405, 0.0
      %v431 = vmax.f32 %v369, 0.0
      %v432 = vmax.f32 %v407, 0.0
      %v433 = vmax.f32 %v372, 0.0
      %v434 = vmax.f32 %v410, 0.0
      %v435 = vsub.f32 0.0, %v413
      %v436 = vsub.f32 0.0, %v414
      %v437 = vsub.f32 0.0, %v415
      %v438 = vsub.f32 0.0, %v416
      %v439 = vsub.f32 0.0, %v417
      %v440 = vsub.f32 0.0, %v418
      %v441 = vsub.f32 0.0, %v419
      %v442 = vsub.f32 0.0, %v420
      %v443 = vsub.f32 0.0, %v421
      %v444 = vsub.f32 0.0, %v422
      %v445 = vsub.f32 0.0, %v423
      %v446 = vsub.f32 0.0, %v424
      %v447 = vsub.f32 0.0, %v425
      %v448 = vsub.f32 0.0, %v426
      %v449 = vsub.f32 0.0, %v427
      %v450 = vsub.f32 0.0, %v428
      %v451 = vsub.f32 0.0, %v429
      %v452 = vsub.f32 0.0, %v430
      %v453 = vsub.f32 0.0, %v431
      %v454 = vsub.f32 0.0, %v432
      %v455 = vsub.f32 0.0, %v433
      %v456 = vsub.f32 0.0, %v434
      %v457 = vmul.f32 %v435, 1.442695
      %v458 = vpow.pop %v457
      %v459 = vmul.f32 %v436, 1.442695
      %v460 = vpow.pop %v459
      %v461 = vmul.f32 %v437, 1.442695
      %v462 = vpow.pop %v461
      %v463 = vmul.f32 %v438, 1.442695
      %v464 = vpow.pop %v463
      %v465 = vmul.f32 %v439, 1.442695
      %v466 = vpow.pop %v465
      %v467 = vmul.f32 %v440, 1.442695
      %v468 = vpow.pop %v467
      %v469 = vmul.f32 %v441, 1.442695
      %v470 = vpow.pop %v469
      %v471 = vmul.f32 %v442, 1.442695
      %v472 = vpow.pop %v471
      %v473 = vmul.f32 %v443, 1.442695
      %v474 = vpow.pop %v473
      %v475 = vmul.f32 %v444, 1.442695
      %v476 = vpow.pop %v475
      %v477 = vmul.f32 %v445, 1.442695
      %v478 = vpow.pop %v477
      %v479 = vmul.f32 %v446, 1.442695
      %v480 = vpow.pop %v479
      %v481 = vmul.f32 %v447, 1.442695
      %v482 = vpow.pop %v481
      %v483 = vmul.f32 %v448, 1.442695
      %v484 = vpow.pop %v483
      %v485 = vmul.f32 %v449, 1.442695
      %v486 = vpow.pop %v485
      %v487 = vmul.f32 %v450, 1.442695
      %v488 = vpow.pop %v487
      %v489 = vmul.f32 %v451, 1.442695
      %v490 = vpow.pop %v489
      %v491 = vmul.f32 %v452, 1.442695
      %v492 = vpow.pop %v491
      %v493 = vmul.f32 %v453, 1.442695
      %v494 = vpow.pop %v493
      %v495 = vmul.f32 %v454, 1.442695
      %v496 = vpow.pop %v495
      %v497 = vmul.f32 %v455, 1.442695
      %v498 = vpow.pop %v497
      %v499 = vmul.f32 %v456, 1.442695
      %v500 = vpow.pop %v499
      %v501 = vadd.f32 %v458, 1.0
      %v502 = vadd.f32 %v460, 1.0
      %v503 = vadd.f32 %v462, 1.0
      %v504 = vadd.f32 %v464, 1.0
      %v505 = vadd.f32 %v466, 1.0
      %v506 = vadd.f32 %v468, 1.0
      %v507 = vadd.f32 %v470, 1.0
      %v508 = vadd.f32 %v472, 1.0
      %v509 = vadd.f32 %v474, 1.0
      %v510 = vadd.f32 %v476, 1.0
      %v511 = vadd.f32 %v478, 1.0
      %v512 = vadd.f32 %v480, 1.0
      %v513 = vadd.f32 %v482, 1.0
      %v514 = vadd.f32 %v484, 1.0
      %v515 = vadd.f32 %v486, 1.0
      %v516 = vadd.f32 %v488, 1.0
      %v517 = vadd.f32 %v490, 1.0
      %v518 = vadd.f32 %v492, 1.0
      %v519 = vadd.f32 %v494, 1.0
      %v520 = vadd.f32 %v496, 1.0
      %v521 = vadd.f32 %v498, 1.0
      %v522 = vadd.f32 %v500, 1.0
      %v523 = vrcp.pop %v501
      %v524 = vmul.f32 %v501, %v523
      %v525 = vsub.f32 1.0, %v524
      %v526 = vmul.f32 %v523, %v525
      %v527 = vadd.f32 %v523, %v526
      %vm528 = vweird.f32 %v501
      %vm529 = vweird.f32 %v523
      %vm530 = vmor %vm528, %vm529
      %v531 = vsel %vm530, %v523, %v527
      %v532 = vand.u32 2147483647, %v501
      %vm533 = vcmp.eq.f32.partialorder %v532, 8.507059e+37
      %v534 = vand.u32 %v501, 2147483648
      %v535 = vor.u32 1.1754944e-38, %v534
      %v536 = vsel %vm533, %v535, %v531
      %v537 = vmul.f32 1.0, %v536
      %v538 = vrcp.pop %v502
      %v539 = vmul.f32 %v502, %v538
      %v540 = vsub.f32 1.0, %v539
      %v541 = vmul.f32 %v538, %v540
      %v542 = vadd.f32 %v538, %v541
      %vm543 = vweird.f32 %v502
      %vm544 = vweird.f32 %v538
      %vm545 = vmor %vm543, %vm544
      %v546 = vsel %vm545, %v538, %v542
      %v547 = vand.u32 2147483647, %v502
      %vm548 = vcmp.eq.f32.partialorder %v547, 8.507059e+37
      %v549 = vand.u32 %v502, 2147483648
      %v550 = vor.u32 1.1754944e-38, %v549
      %v551 = vsel %vm548, %v550, %v546
      %v552 = vmul.f32 1.0, %v551
      %v553 = vrcp.pop %v503
      %v554 = vmul.f32 %v503, %v553
      %v555 = vsub.f32 1.0, %v554
      %v556 = vmul.f32 %v553, %v555
      %v557 = vadd.f32 %v553, %v556
      %vm558 = vweird.f32 %v503
      %vm559 = vweird.f32 %v553
      %vm560 = vmor %vm558, %vm559
      %v561 = vsel %vm560, %v553, %v557
      %v562 = vand.u32 2147483647, %v503
      %vm563 = vcmp.eq.f32.partialorder %v562, 8.507059e+37
      %v564 = vand.u32 %v503, 2147483648
      %v565 = vor.u32 1.1754944e-38, %v564
      %v566 = vsel %vm563, %v565, %v561
      %v567 = vmul.f32 1.0, %v566
      %v568 = vrcp.pop %v504
      %v569 = vmul.f32 %v504, %v568
      %v570 = vsub.f32 1.0, %v569
      %v571 = vmul.f32 %v568, %v570
      %v572 = vadd.f32 %v568, %v571
      %vm573 = vweird.f32 %v504
      %vm574 = vweird.f32 %v568
      %vm575 = vmor %vm573, %vm574
      %v576 = vsel %vm575, %v568, %v572
      %v577 = vand.u32 2147483647, %v504
      %vm578 = vcmp.eq.f32.partialorder %v577, 8.507059e+37
      %v579 = vand.u32 %v504, 2147483648
      %v580 = vor.u32 1.1754944e-38, %v579
      %v581 = vsel %vm578, %v580, %v576
      %v582 = vmul.f32 1.0, %v581
      %v583 = vrcp.pop %v505
      %v584 = vmul.f32 %v505, %v583
      %v585 = vsub.f32 1.0, %v584
      %v586 = vmul.f32 %v583, %v585
      %v587 = vadd.f32 %v583, %v586
      %vm588 = vweird.f32 %v505
      %vm589 = vweird.f32 %v583
      %vm590 = vmor %vm588, %vm589
      %v591 = vsel %vm590, %v583, %v587
      %v592 = vand.u32 2147483647, %v505
      %vm593 = vcmp.eq.f32.partialorder %v592, 8.507059e+37
      %v594 = vand.u32 %v505, 2147483648
      %v595 = vor.u32 1.1754944e-38, %v594
      %v596 = vsel %vm593, %v595, %v591
      %v597 = vmul.f32 1.0, %v596
      %v598 = vrcp.pop %v506
      %v599 = vmul.f32 %v506, %v598
      %v600 = vsub.f32 1.0, %v599
      %v601 = vmul.f32 %v598, %v600
      %v602 = vadd.f32 %v598, %v601
      %vm603 = vweird.f32 %v506
      %vm604 = vweird.f32 %v598
      %vm605 = vmor %vm603, %vm604
      %v606 = vsel %vm605, %v598, %v602
      %v607 = vand.u32 2147483647, %v506
      %vm608 = vcmp.eq.f32.partialorder %v607, 8.507059e+37
      %v609 = vand.u32 %v506, 2147483648
      %v610 = vor.u32 1.1754944e-38, %v609
      %v611 = vsel %vm608, %v610, %v606
      %v612 = vmul.f32 1.0, %v611
      %v613 = vrcp.pop %v507
      %v614 = vmul.f32 %v507, %v613
      %v615 = vsub.f32 1.0, %v614
      %v616 = vmul.f32 %v613, %v615
      %v617 = vadd.f32 %v613, %v616
      %vm618 = vweird.f32 %v507
      %vm619 = vweird.f32 %v613
      %vm620 = vmor %vm618, %vm619
      %v621 = vsel %vm620, %v613, %v617
      %v622 = vand.u32 2147483647, %v507
      %vm623 = vcmp.eq.f32.partialorder %v622, 8.507059e+37
      %v624 = vand.u32 %v507, 2147483648
      %v625 = vor.u32 1.1754944e-38, %v624
      %v626 = vsel %vm623, %v625, %v621
      %v627 = vmul.f32 1.0, %v626
      %v628 = vrcp.pop %v508
      %v629 = vmul.f32 %v508, %v628
      %v630 = vsub.f32 1.0, %v629
      %v631 = vmul.f32 %v628, %v630
      %v632 = vadd.f32 %v628, %v631
      %vm633 = vweird.f32 %v508
      %vm634 = vweird.f32 %v628
      %vm635 = vmor %vm633, %vm634
      %v636 = vsel %vm635, %v628, %v632
      %v637 = vand.u32 2147483647, %v508
      %vm638 = vcmp.eq.f32.partialorder %v637, 8.507059e+37
      %v639 = vand.u32 %v508, 2147483648
      %v640 = vor.u32 1.1754944e-38, %v639
      %v641 = vsel %vm638, %v640, %v636
      %v642 = vmul.f32 1.0, %v641
      %v643 = vrcp.pop %v509
      %v644 = vmul.f32 %v509, %v643
      %v645 = vsub.f32 1.0, %v644
      %v646 = vmul.f32 %v643, %v645
      %v647 = vadd.f32 %v643, %v646
      %vm648 = vweird.f32 %v509
      %vm649 = vweird.f32 %v643
      %vm650 = vmor %vm648, %vm649
      %v651 = vsel %vm650, %v643, %v647
      %v652 = vand.u32 2147483647, %v509
      %vm653 = vcmp.eq.f32.partialorder %v652, 8.507059e+37
      %v654 = vand.u32 %v509, 2147483648
      %v655 = vor.u32 1.1754944e-38, %v654
      %v656 = vsel %vm653, %v655, %v651
      %v657 = vmul.f32 1.0, %v656
      %v658 = vrcp.pop %v510
      %v659 = vmul.f32 %v510, %v658
      %v660 = vsub.f32 1.0, %v659
      %v661 = vmul.f32 %v658, %v660
      %v662 = vadd.f32 %v658, %v661
      %vm663 = vweird.f32 %v510
      %vm664 = vweird.f32 %v658
      %vm665 = vmor %vm663, %vm664
      %v666 = vsel %vm665, %v658, %v662
      %v667 = vand.u32 2147483647, %v510
      %vm668 = vcmp.eq.f32.partialorder %v667, 8.507059e+37
      %v669 = vand.u32 %v510, 2147483648
      %v670 = vor.u32 1.1754944e-38, %v669
      %v671 = vsel %vm668, %v670, %v666
      %v672 = vmul.f32 1.0, %v671
      %v673 = vrcp.pop %v511
      %v674 = vmul.f32 %v511, %v673
      %v675 = vsub.f32 1.0, %v674
      %v676 = vmul.f32 %v673, %v675
      %v677 = vadd.f32 %v673, %v676
      %vm678 = vweird.f32 %v511
      %vm679 = vweird.f32 %v673
      %vm680 = vmor %vm678, %vm679
      %v681 = vsel %vm680, %v673, %v677
      %v682 = vand.u32 2147483647, %v511
      %vm683 = vcmp.eq.f32.partialorder %v682, 8.507059e+37
      %v684 = vand.u32 %v511, 2147483648
      %v685 = vor.u32 1.1754944e-38, %v684
      %v686 = vsel %vm683, %v685, %v681
      %v687 = vmul.f32 1.0, %v686
      %v688 = vrcp.pop %v512
      %v689 = vmul.f32 %v512, %v688
      %v690 = vsub.f32 1.0, %v689
      %v691 = vmul.f32 %v688, %v690
      %v692 = vadd.f32 %v688, %v691
      %vm693 = vweird.f32 %v512
      %vm694 = vweird.f32 %v688
      %vm695 = vmor %vm693, %vm694
      %v696 = vsel %vm695, %v688, %v692
      %v697 = vand.u32 2147483647, %v512
      %vm698 = vcmp.eq.f32.partialorder %v697, 8.507059e+37
      %v699 = vand.u32 %v512, 2147483648
      %v700 = vor.u32 1.1754944e-38, %v699
      %v701 = vsel %vm698, %v700, %v696
      %v702 = vmul.f32 1.0, %v701
      %v703 = vrcp.pop %v513
      %v704 = vmul.f32 %v513, %v703
      %v705 = vsub.f32 1.0, %v704
      %v706 = vmul.f32 %v703, %v705
      %v707 = vadd.f32 %v703, %v706
      %vm708 = vweird.f32 %v513
      %vm709 = vweird.f32 %v703
      %vm710 = vmor %vm708, %vm709
      %v711 = vsel %vm710, %v703, %v707
      %v712 = vand.u32 2147483647, %v513
      %vm713 = vcmp.eq.f32.partialorder %v712, 8.507059e+37
      %v714 = vand.u32 %v513, 2147483648
      %v715 = vor.u32 1.1754944e-38, %v714
      %v716 = vsel %vm713, %v715, %v711
      %v717 = vmul.f32 1.0, %v716
      %v718 = vrcp.pop %v514
      %v719 = vmul.f32 %v514, %v718
      %v720 = vsub.f32 1.0, %v719
      %v721 = vmul.f32 %v718, %v720
      %v722 = vadd.f32 %v718, %v721
      %vm723 = vweird.f32 %v514
      %vm724 = vweird.f32 %v718
      %vm725 = vmor %vm723, %vm724
      %v726 = vsel %vm725, %v718, %v722
      %v727 = vand.u32 2147483647, %v514
      %vm728 = vcmp.eq.f32.partialorder %v727, 8.507059e+37
      %v729 = vand.u32 %v514, 2147483648
      %v730 = vor.u32 1.1754944e-38, %v729
      %v731 = vsel %vm728, %v730, %v726
      %v732 = vmul.f32 1.0, %v731
      %v733 = vrcp.pop %v515
      %v734 = vmul.f32 %v515, %v733
      %v735 = vsub.f32 1.0, %v734
      %v736 = vmul.f32 %v733, %v735
      %v737 = vadd.f32 %v733, %v736
      %vm738 = vweird.f32 %v515
      %vm739 = vweird.f32 %v733
      %vm740 = vmor %vm738, %vm739
      %v741 = vsel %vm740, %v733, %v737
      %v742 = vand.u32 2147483647, %v515
      %vm743 = vcmp.eq.f32.partialorder %v742, 8.507059e+37
      %v744 = vand.u32 %v515, 2147483648
      %v745 = vor.u32 1.1754944e-38, %v744
      %v746 = vsel %vm743, %v745, %v741
      %v747 = vmul.f32 1.0, %v746
      %v748 = vrcp.pop %v516
      %v749 = vmul.f32 %v516, %v748
      %v750 = vsub.f32 1.0, %v749
      %v751 = vmul.f32 %v748, %v750
      %v752 = vadd.f32 %v748, %v751
      %vm753 = vweird.f32 %v516
      %vm754 = vweird.f32 %v748
      %vm755 = vmor %vm753, %vm754
      %v756 = vsel %vm755, %v748, %v752
      %v757 = vand.u32 2147483647, %v516
      %vm758 = vcmp.eq.f32.partialorder %v757, 8.507059e+37
      %v759 = vand.u32 %v516, 2147483648
      %v760 = vor.u32 1.1754944e-38, %v759
      %v761 = vsel %vm758, %v760, %v756
      %v762 = vmul.f32 1.0, %v761
      %v763 = vrcp.pop %v517
      %v764 = vmul.f32 %v517, %v763
      %v765 = vsub.f32 1.0, %v764
      %v766 = vmul.f32 %v763, %v765
      %v767 = vadd.f32 %v763, %v766
      %vm768 = vweird.f32 %v517
      %vm769 = vweird.f32 %v763
      %vm770 = vmor %vm768, %vm769
      %v771 = vsel %vm770, %v763, %v767
      %v772 = vand.u32 2147483647, %v517
      %vm773 = vcmp.eq.f32.partialorder %v772, 8.507059e+37
      %v774 = vand.u32 %v517, 2147483648
      %v775 = vor.u32 1.1754944e-38, %v774
      %v776 = vsel %vm773, %v775, %v771
      %v777 = vmul.f32 1.0, %v776
      %v778 = vrcp.pop %v518
      %v779 = vmul.f32 %v518, %v778
      %v780 = vsub.f32 1.0, %v779
      %v781 = vmul.f32 %v778, %v780
      %v782 = vadd.f32 %v778, %v781
      %vm783 = vweird.f32 %v518
      %vm784 = vweird.f32 %v778
      %vm785 = vmor %vm783, %vm784
      %v786 = vsel %vm785, %v778, %v782
      %v787 = vand.u32 2147483647, %v518
      %vm788 = vcmp.eq.f32.partialorder %v787, 8.507059e+37
      %v789 = vand.u32 %v518, 2147483648
      %v790 = vor.u32 1.1754944e-38, %v789
      %v791 = vsel %vm788, %v790, %v786
      %v792 = vmul.f32 1.0, %v791
      %v793 = vrcp.pop %v519
      %v794 = vmul.f32 %v519, %v793
      %v795 = vsub.f32 1.0, %v794
      %v796 = vmul.f32 %v793, %v795
      %v797 = vadd.f32 %v793, %v796
      %vm798 = vweird.f32 %v519
      %vm799 = vweird.f32 %v793
      %vm800 = vmor %vm798, %vm799
      %v801 = vsel %vm800, %v793, %v797
      %v802 = vand.u32 2147483647, %v519
      %vm803 = vcmp.eq.f32.partialorder %v802, 8.507059e+37
      %v804 = vand.u32 %v519, 2147483648
      %v805 = vor.u32 1.1754944e-38, %v804
      %v806 = vsel %vm803, %v805, %v801
      %v807 = vmul.f32 1.0, %v806
      %v808 = vrcp.pop %v520
      %v809 = vmul.f32 %v520, %v808
      %v810 = vsub.f32 1.0, %v809
      %v811 = vmul.f32 %v808, %v810
      %v812 = vadd.f32 %v808, %v811
      %vm813 = vweird.f32 %v520
      %vm814 = vweird.f32 %v808
      %vm815 = vmor %vm813, %vm814
      %v816 = vsel %vm815, %v808, %v812
      %v817 = vand.u32 2147483647, %v520
      %vm818 = vcmp.eq.f32.partialorder %v817, 8.507059e+37
      %v819 = vand.u32 %v520, 2147483648
      %v820 = vor.u32 1.1754944e-38, %v819
      %v821 = vsel %vm818, %v820, %v816
      %v822 = vmul.f32 1.0, %v821
      %v823 = vrcp.pop %v521
      %v824 = vmul.f32 %v521, %v823
      %v825 = vsub.f32 1.0, %v824
      %v826 = vmul.f32 %v823, %v825
      %v827 = vadd.f32 %v823, %v826
      %vm828 = vweird.f32 %v521
      %vm829 = vweird.f32 %v823
      %vm830 = vmor %vm828, %vm829
      %v831 = vsel %vm830, %v823, %v827
      %v832 = vand.u32 2147483647, %v521
      %vm833 = vcmp.eq.f32.partialorder %v832, 8.507059e+37
      %v834 = vand.u32 %v521, 2147483648
      %v835 = vor.u32 1.1754944e-38, %v834
      %v836 = vsel %vm833, %v835, %v831
      %v837 = vmul.f32 1.0, %v836
      %v838 = vrcp.pop %v522
      %v839 = vmul.f32 %v522, %v838
      %v840 = vsub.f32 1.0, %v839
      %v841 = vmul.f32 %v838, %v840
      %v842 = vadd.f32 %v838, %v841
      %vm843 = vweird.f32 %v522
      %vm844 = vweird.f32 %v838
      %vm845 = vmor %vm843, %vm844
      %v846 = vsel %vm845, %v838, %v842
      %v847 = vand.u32 2147483647, %v522
      %vm848 = vcmp.eq.f32.partialorder %v847, 8.507059e+37
      %v849 = vand.u32 %v522, 2147483648
      %v850 = vor.u32 1.1754944e-38, %v849
      %v851 = vsel %vm848, %v850, %v846
      %v852 = vmul.f32 1.0, %v851
      %v853 = vadd.f32 %v537, 1.0
      %v854 = vadd.f32 %v552, 1.0
      %v855 = vadd.f32 %v567, 1.0
      %v856 = vadd.f32 %v582, 1.0
      %v857 = vadd.f32 %v597, 1.0
      %v858 = vadd.f32 %v612, 1.0
      %v859 = vadd.f32 %v627, 1.0
      %v860 = vadd.f32 %v642, 1.0
      %v861 = vadd.f32 %v657, 1.0
      %v862 = vadd.f32 %v672, 1.0
      %v863 = vadd.f32 %v687, 1.0
      %v864 = vadd.f32 %v702, 1.0
      %v865 = vadd.f32 %v717, 1.0
      %v866 = vadd.f32 %v732, 1.0
      %v867 = vadd.f32 %v747, 1.0
      %v868 = vadd.f32 %v762, 1.0
      %v869 = vadd.f32 %v777, 1.0
      %v870 = vadd.f32 %v792, 1.0
      %v871 = vadd.f32 %v807, 1.0
      %v872 = vadd.f32 %v822, 1.0
      %v873 = vadd.f32 %v837, 1.0
      %v874 = vadd.f32 %v852, 1.0
      %v875 = vld [vmem:[%s2] sm:$0xff]
      %v876 = vld [vmem:[%s2 + $0x8] sm:$0xff]
      %v877 = vld [vmem:[%s2 + $0x10] sm:$0xff]
      %v878 = vld [vmem:[%s2 + $0x18] sm:$0xff]
      %v879 = vld [vmem:[%s2 + $0x20] sm:$0xff]
      %v880 = vld [vmem:[%s2 + $0x28] sm:$0xff]
      %v881 = vld [vmem:[%s2 + $0x30] sm:$0xff]
      %v882 = vld [vmem:[%s2 + $0x38] sm:$0xff]
      %v883 = vld [vmem:[%s2 + $0x40] sm:$0xff]
      %v884 = vld [vmem:[%s2 + $0x48] sm:$0xff]
      %v885 = vld [vmem:[%s2 + $0x50] sm:$0x1f]
      %vm886 = vcmp.gt.f32.partialorder %v875, 0.5
      %vm887 = vcmp.gt.f32.partialorder %v876, 0.5
      %vm888 = vcmp.gt.f32.partialorder %v877, 0.5
      %vm889 = vcmp.gt.f32.partialorder %v878, 0.5
      %vm890 = vcmp.gt.f32.partialorder %v879, 0.5
      %vm891 = vcmp.gt.f32.partialorder %v880, 0.5
      %vm892 = vcmp.gt.f32.partialorder %v881, 0.5
      %vm893 = vcmp.gt.f32.partialorder %v882, 0.5
      %vm894 = vcmp.gt.f32.partialorder %v883, 0.5
      %vm895 = vcmp.gt.f32.partialorder %v884, 0.5
      %vm896 = vcmp.gt.f32.partialorder %v885, 0.5
      %v897 = vsel %vm886, 1, 0
      %v898 = vsel %vm887, 1, 0
      %v899 = vsel %vm888, 1, 0
      %v900 = vsel %vm889, 1, 0
      %v901 = vsel %vm890, 1, 0
      %v902 = vsel %vm891, 1, 0
      %v903 = vsel %vm892, 1, 0
      %v904 = vsel %vm893, 1, 0
      %v905 = vsel %vm894, 1, 0
      %v906 = vsel %vm895, 1, 0
      %v907 = vsel %vm896, 1, 0
      %908 = vset.pattern.permute.xlu0 0
      %909 = vperm.xlu0 %908, %v897
      %v910 = vpop.permute.xlu0 %909
      %911 = vset.pattern.permute.xlu0 0
      %912 = vperm.xlu0 %911, %v898
      %v913 = vpop.permute.xlu0 %912
      %914 = vset.pattern.permute.xlu0 0
      %915 = vperm.xlu0 %914, %v899
      %v916 = vpop.permute.xlu0 %915
      %917 = vset.pattern.permute.xlu0 0
      %918 = vperm.xlu0 %917, %v900
      %v919 = vpop.permute.xlu0 %918
      %920 = vset.pattern.permute.xlu0 0
      %921 = vperm.xlu0 %920, %v901
      %v922 = vpop.permute.xlu0 %921
      %923 = vset.pattern.permute.xlu0 0
      %924 = vperm.xlu0 %923, %v902
      %v925 = vpop.permute.xlu0 %924
      %926 = vset.pattern.permute.xlu0 0
      %927 = vperm.xlu0 %926, %v903
      %v928 = vpop.permute.xlu0 %927
      %929 = vset.pattern.permute.xlu0 0
      %930 = vperm.xlu0 %929, %v904
      %v931 = vpop.permute.xlu0 %930
      %932 = vset.pattern.permute.xlu0 0
      %933 = vperm.xlu0 %932, %v905
      %v934 = vpop.permute.xlu0 %933
      %935 = vset.pattern.permute.xlu0 0
      %936 = vperm.xlu0 %935, %v906
      %v937 = vpop.permute.xlu0 %936
      %938 = vset.pattern.permute.xlu0 0
      %939 = vperm.xlu0 %938, %v907
      %v940 = vpop.permute.xlu0 %939
      %vm941 = vcmp.eq.s32.totalorder %v910, 1
      %vm942 = vcmp.eq.s32.totalorder %v913, 1
      %vm943 = vcmp.eq.s32.totalorder %v916, 1
      %vm944 = vcmp.eq.s32.totalorder %v919, 1
      %vm945 = vcmp.eq.s32.totalorder %v922, 1
      %vm946 = vcmp.eq.s32.totalorder %v925, 1
      %vm947 = vcmp.eq.s32.totalorder %v928, 1
      %vm948 = vcmp.eq.s32.totalorder %v931, 1
      %vm949 = vcmp.eq.s32.totalorder %v934, 1
      %vm950 = vcmp.eq.s32.totalorder %v937, 1
      %vm951 = vcmp.eq.s32.totalorder %v940, 1
      %v952 = vsel %vm941, %v853, %v413
      %v953 = vsel %vm941, %v854, %v414
      %v954 = vsel %vm942, %v855, %v415
      %v955 = vsel %vm942, %v856, %v416
      %v956 = vsel %vm943, %v857, %v417
      %v957 = vsel %vm943, %v858, %v418
      %v958 = vsel %vm944, %v859, %v419
      %v959 = vsel %vm944, %v860, %v420
      %v960 = vsel %vm945, %v861, %v421
      %v961 = vsel %vm945, %v862, %v422
      %v962 = vsel %vm946, %v863, %v423
      %v963 = vsel %vm946, %v864, %v424
      %v964 = vsel %vm947, %v865, %v425
      %v965 = vsel %vm947, %v866, %v426
      %v966 = vsel %vm948, %v867, %v427
      %v967 = vsel %vm948, %v868, %v428
      %v968 = vsel %vm949, %v869, %v429
      %v969 = vsel %vm949, %v870, %v430
      %v970 = vsel %vm950, %v871, %v431
      %v971 = vsel %vm950, %v872, %v432
      %v972 = vsel %vm951, %v873, %v433
      %v973 = vsel %vm951, %v874, %v434
      %v974 = vpack.c.bf16 %v953, %v952
      %v975 = vpack.c.bf16 %v955, %v954
      %v976 = vpack.c.bf16 %v957, %v956
      %v977 = vpack.c.bf16 %v959, %v958
      %v978 = vpack.c.bf16 %v961, %v960
      %v979 = vpack.c.bf16 %v963, %v962
      %v980 = vpack.c.bf16 %v965, %v964
      %v981 = vpack.c.bf16 %v967, %v966
      %v982 = vpack.c.bf16 %v969, %v968
      %v983 = vpack.c.bf16 %v971, %v970
      %v984 = vpack.c.bf16 %v973, %v972
      %985 = vst [vmem:[%s208] sm:$0xff] %v974
      %986 = vst [vmem:[%s208 + $0x8] sm:$0xff] %v975
      %987 = vst [vmem:[%s208 + $0x10] sm:$0xff] %v976
      %988 = vst [vmem:[%s208 + $0x18] sm:$0xff] %v977
      %989 = vst [vmem:[%s208 + $0x20] sm:$0xff] %v978
      %990 = vst [vmem:[%s208 + $0x28] sm:$0xff] %v979
      %991 = vst [vmem:[%s208 + $0x30] sm:$0xff] %v980
      %992 = vst [vmem:[%s208 + $0x38] sm:$0xff] %v981
      %993 = vst [vmem:[%s208 + $0x40] sm:$0xff] %v982
      %994 = vst [vmem:[%s208 + $0x48] sm:$0xff] %v983
      %vm995 = vcmask 1042432
      %vm996 = vsmask.f32 2304
      %vm997 = vmand %vm995, %vm996
      %vm998 = vcmask 1046532
      %vm999 = vsmask.f32 6400
      %vm1000 = vmand %vm998, %vm999
      %vm1001 = vmor %vm1000, %vm997
      %v1002 = vld [vmem:[%s208 + $0x50] sm:$0x77]
      %v1003 = vsel %vm1001, %v984, %v1002
      %1004 = vst [vmem:[%s208 + $0x50] sm:$0x77] %v1003
      %s1005 = smul.u32 2, %s19
      %p1006 = scmp.lt.s32.totalorder %s18, 1
      %s1007 = scalar_select %p1006, %s18, 1
      %p1008 = scmp.lt.s32.totalorder %s1005, 1
      %s1009 = scalar_select %p1008, %s1005, 1
      %s1010 = smul.addr %s1007, 22
      %s1011 = sadd.s32 %s1009, %s1010
      %s1012 = smul.addr %s1011, 4
      %s1013 = scalar_lea.vmem %s3, %s1012
      // Predicated region
      $region33: #{net_forward.1} parent=31 // pred_check
        %p1014 = pneg %p116
      $region34: #{net_forward.1} parent=31 // pred_check_branch
        %1016 = sbr.rel (%p1014) target = $region36
      $region35: #{net_forward.1} parent=31 // pred_region
        %s1017 = smul.u32 2, %s19
      $region36: #{net_forward.1} parent=31 // pred_fallthru
        _
    $region32: #{net_forward.1} parent=5 // pred_fallthru
      _
    %p1018 = scmp.le.s32.totalorder 2, %s9
    // Predicated region
    $region37: #{net_forward.1} parent=5 // pred_check
      %p1019 = pneg %p1018
    $region38: #{net_forward.1} parent=5 // pred_check_branch
      %1021 = sbr.rel (%p1019) target = $region40
    $region39: #{net_forward.1} parent=5 // pred_region
      %s1022 = ssub.s32 %s9, 2
      // Predicated region
      $region41: #{net_forward.1} parent=39 // pred_check
        %p1023 = pneg %p122
      $region42: #{net_forward.1} parent=39 // pred_check_branch
        %1025 = sbr.rel (%p1023) target = $region44
      $region43: #{net_forward.1} parent=39 // pred_region
        %s1026 = smul.u32 2, %s21
        %p1027 = scmp.lt.s32.totalorder %s20, 1
        %s1028 = scalar_select %p1027, %s20, 1
        %p1029 = scmp.lt.s32.totalorder %s1026, 1
        %s1030 = scalar_select %p1029, %s1026, 1
        %s1031 = smul.addr %s1028, 22
        %s1032 = sadd.s32 %s1030, %s1031
        %s1033 = smul.addr %s1032, 4
        %s1034 = scalar_lea.vmem %s3, %s1033
      $region44: #{net_forward.1} parent=39 // pred_fallthru
        _
    $region40: #{net_forward.1} parent=5 // pred_fallthru
      _
  $region6: #{net_forward.1} parent=0 // loop_footer
    %s13 = sadd.s32 1, %s9
  $region7: #{net_forward.1} parent=0 // loop_footer_branch
    %8 = sbr.rel target = $region3
  $region8: #{net_forward.1} parent=0 // loop_exit
    _

</llo_original>
